<compile_context>
chip_gen: v6e
topology: v6e:2x2x1
jax: 0.10.0
libtpu: 0.0.40
codegen_flags: <defaults>
</compile_context>

<pallas_src>
import functools

import jax
import jax.numpy as jnp
from jax.experimental import pallas as pl
from jax.experimental.pallas import tpu as pltpu


def _round_up(x, m):
    return (x + m - 1) // m * m


def _focal_loss_kernel(logits_ref, target_ref, neg_hi_ref, neg_lo_ref, out_ref,
                       *, gamma, batch, tb, has_pad):
    i = pl.program_id(0)

    x = logits_ref[...].astype(jnp.float32)        # (C, tb)  classes x batch-lanes
    tgt = target_ref[...].astype(jnp.int32)        # (1, tb)  int8 -> int32 widen
    neg_hi = neg_hi_ref[...]                       # (C, 1)   -alpha*(1-smoothing)
    neg_lo = neg_lo_ref[...]                       # (C, 1)   -alpha*smoothing/C

    c = x.shape[0]

    # Numerically stable log-softmax over the class (sublane) axis.
    m = jnp.max(x, axis=0, keepdims=True)          # (1, tb)
    z = x - m
    e = jnp.exp(z)                                 # (C, tb)  single EUP exp pass
    s = jnp.sum(e, axis=0, keepdims=True)          # (1, tb)
    log_prob = z - jnp.log(s)                      # (C, tb)
    # prob via e * (1/s): exact reciprocal on the small (1, tb) vector instead
    # of a second full-size exp(log_prob).
    prob = e * pl.reciprocal(s, approx=False)

    # Smoothed-label * alpha * (-1), fused into a single select between two
    # resident per-class constants.
    class_ids = jax.lax.broadcasted_iota(jnp.int32, (c, tb), 0)
    onehot = class_ids == tgt                      # (C, tb)
    weight = jnp.where(onehot, neg_hi, neg_lo)     # (C, tb) via lane-broadcast

    # Focal term: plain multiply for the default gamma=2.
    omp = 1.0 - prob
    if gamma == 2:
        focal = omp * omp
    elif gamma == 1:
        focal = omp
    else:
        focal = omp ** gamma

    loss = weight * focal * log_prob               # minus sign folded into weight
    per_sample = jnp.sum(loss, axis=0, keepdims=True)   # (1, tb)

    if has_pad:
        last = pl.num_programs(0) - 1

        # Padded batch columns only exist in the final tile: mask there only.
        @pl.when(i == last)
        def _():
            col = i * tb + jax.lax.broadcasted_iota(jnp.int32, (1, tb), 1)
            masked = jnp.where(col < batch, per_sample, jnp.float32(0.0))
            out_ref[...] = jnp.sum(masked, axis=1, keepdims=True).reshape(1, 1, 1)

        @pl.when(i < last)
        def _():
            out_ref[...] = jnp.sum(per_sample, axis=1,
                                   keepdims=True).reshape(1, 1, 1)
    else:
        out_ref[...] = jnp.sum(per_sample, axis=1, keepdims=True).reshape(1, 1, 1)


def focal_loss_with_label_smoothing(logits, target, alpha, *,
                                    gamma=2, smoothing=0.1, n_classes=3,
                                    block_b=65536):
    """logits: (B, C) float; target: (B,) int; alpha: (C,) float.
    Returns a scalar float32 loss = mean over B of the per-sample class sums."""
    b, c = logits.shape
    assert c == n_classes

    # Lane tiling over the batch axis.  Cap tb so the VMEM estimate below stays
    # comfortably under v7x's 64 MiB physical VMEM.
    block_b = max(128, _round_up(block_b, 128))
    tb = min(block_b, _round_up(b, 128), 131072)
    n_tiles = pl.cdiv(b, tb)
    b_pad = n_tiles * tb
    has_pad = b_pad != b

    # Lane-dense (C, B) layout, classes unpadded.
    # TODO(synk): if the producer can emit logits already as (C, B) (or bf16),
    # accept that layout directly and skip this transpose/pad copy.
    logits_t = jnp.pad(logits.T, ((0, 0), (0, b_pad - b)))
    target_t = jnp.pad(target.astype(jnp.int8).reshape(1, b),
                       ((0, 0), (0, b_pad - b)))

    # Fold alpha, label smoothing and the leading minus sign into two resident
    # per-class vectors.
    alpha_f = alpha.astype(jnp.float32).reshape(c, 1)
    neg_hi = -alpha_f * jnp.float32(1.0 - smoothing)          # at target class
    neg_lo = -alpha_f * jnp.float32(smoothing / n_classes)    # elsewhere

    kernel = functools.partial(_focal_loss_kernel, gamma=gamma, batch=b, tb=tb,
                               has_pad=has_pad)

    # VMEM budget: 2 pipeline buffers x (logits tile + target tile, both padded
    # to 8/32 sublanes inside VMEM => ~32*tb bytes each) + ~8 staged (C, tb)
    # f32 temporaries (~32*tb bytes each).  Floor at 32 MiB (v5e default scoped
    # limit is 16 MiB), cap at 56 MiB (v7x physical VMEM is 64 MiB).
    vmem_est = 2 * (32 * tb + 32 * tb) + 8 * (32 * tb) + (2 << 20)
    vmem_limit = int(min(max(vmem_est, 32 * 1024 * 1024), 56 * 1024 * 1024))

    partials = pl.pallas_call(
        kernel,
        grid=(n_tiles,),
        out_shape=jax.ShapeDtypeStruct((n_tiles, 1, 1), jnp.float32),
        in_specs=[
            pl.BlockSpec((c, tb), lambda i: (0, i)),   # logits lane tile
            pl.BlockSpec((1, tb), lambda i: (0, i)),   # int8 targets lane tile
            pl.BlockSpec((c, 1), lambda i: (0, 0)),    # resident neg_hi
            pl.BlockSpec((c, 1), lambda i: (0, 0)),    # resident neg_lo
        ],
        # Per-tile partial sums: no shared accumulator block, so the single
        # grid axis can be "parallel" (megacore-sharded on v7x).
        out_specs=pl.BlockSpec((1, 1, 1), lambda i: (i, 0, 0)),
        compiler_params=pltpu.CompilerParams(
            dimension_semantics=("parallel",),
            vmem_limit_bytes=vmem_limit),
    )(logits_t, target_t, neg_hi, neg_lo)

    # Tiny final reduction + mean in JAX.
    return jnp.sum(partials) * jnp.float32(1.0 / b)


def _reference(logits, target, alpha, *, gamma=2, smoothing=0.1, n_classes=3):
    # Pure-JAX reference mirroring the PyTorch forward.
    prob = jax.nn.softmax(logits, axis=1)
    log_prob = jax.nn.log_softmax(logits, axis=1)
    onehot = jax.nn.one_hot(target, n_classes, dtype=jnp.bool_)
    smoothed = jnp.where(onehot, 1.0 - smoothing, smoothing / n_classes)
    focal = alpha[None, :] * (1.0 - prob) ** gamma
    loss = -smoothed * focal * log_prob
    return loss.sum(axis=1).mean()


if __name__ == "__main__":
    key = jax.random.PRNGKey(0)
    n_classes = 3
    batch = 8

    # Deterministic "training labels" giving per-class counts for alpha
    # (alpha[c] = 1 / count[c]), analogous to Counter(y_train) in the script.
    y_train = jnp.array([0, 1, 2, 0, 1, 2, 0, 1], dtype=jnp.int32)
    counts = jnp.bincount(y_train, length=n_classes).astype(jnp.float32)
    alpha = 1.0 / counts

    k_logits, k_target = jax.random.split(key)
    logits = jax.random.normal(k_logits, (batch, n_classes), dtype=jnp.float32)
    target = jax.random.randint(k_target, (batch,), 0, n_classes,
                                dtype=jnp.int32)

    loss = focal_loss_with_label_smoothing(
        logits, target, alpha, gamma=2, smoothing=0.1, n_classes=n_classes)
    loss = jax.block_until_ready(loss)
    ref = _reference(logits, target, alpha,
                     gamma=2, smoothing=0.1, n_classes=n_classes)
    assert jnp.allclose(loss, ref, rtol=1e-5, atol=1e-5), (loss, ref)

    # Second check: multi-tile parallel grid + padded final tile.
    b2 = 300
    k1, k2 = jax.random.split(k_target)
    logits2 = jax.random.normal(k1, (b2, n_classes), dtype=jnp.float32)
    target2 = jax.random.randint(k2, (b2,), 0, n_classes, dtype=jnp.int32)
    loss2 = focal_loss_with_label_smoothing(
        logits2, target2, alpha, gamma=2, smoothing=0.1, n_classes=n_classes,
        block_b=128)
    loss2 = jax.block_until_ready(loss2)
    ref2 = _reference(logits2, target2, alpha,
                      gamma=2, smoothing=0.1, n_classes=n_classes)
    assert jnp.allclose(loss2, ref2, rtol=1e-5, atol=1e-5), (loss2, ref2)

    print("KERNEL_OK")
</pallas_src>

<mosaic_0001>
module attributes {stable_mosaic.version = 11 : i64} {
  func.func @_focal_loss_kernel(%arg0: i32, %arg1: memref<3x128xf32, #tpu.memory_space<vmem>>, %arg2: memref<1x128xi8, #tpu.memory_space<vmem>>, %arg3: memref<3x1xf32, #tpu.memory_space<vmem>>, %arg4: memref<3x1xf32, #tpu.memory_space<vmem>>, %arg5: memref<1x1x1xf32, #tpu.memory_space<vmem>>) attributes {dimension_semantics = [#tpu.dimension_semantics<parallel>], iteration_bounds = array<i64: 1>, scalar_prefetch = 0 : i64, scratch_operands = 0 : i64, tpu.core_type = #tpu.core_type<tc>, window_params = [{transform_indices = @transform_0, window_bounds = array<i64: 3, 128>}, {transform_indices = @transform_1, window_bounds = array<i64: 1, 128>}, {pipeline_mode = #tpu.pipeline_mode<synchronous>, transform_indices = @transform_2, window_bounds = array<i64: 3, 1>}, {pipeline_mode = #tpu.pipeline_mode<synchronous>, transform_indices = @transform_3, window_bounds = array<i64: 3, 1>}, {transform_indices = @transform_4, window_bounds = array<i64: 1, 1, 1>}]} {
    %c0 = arith.constant 0 : index
    %c0_0 = arith.constant 0 : index
    %0 = vector.load %arg1[%c0, %c0_0] : memref<3x128xf32, #tpu.memory_space<vmem>>, vector<3x128xf32>
    %c0_1 = arith.constant 0 : index
    %c0_2 = arith.constant 0 : index
    %1 = vector.load %arg2[%c0_1, %c0_2] : memref<1x128xi8, #tpu.memory_space<vmem>>, vector<1x128xi8>
    %2 = arith.extsi %1 : vector<1x128xi8> to vector<1x128xi32>
    %c0_3 = arith.constant 0 : index
    %c0_4 = arith.constant 0 : index
    %3 = vector.load %arg3[%c0_3, %c0_4] : memref<3x1xf32, #tpu.memory_space<vmem>>, vector<3x1xf32>
    %c0_5 = arith.constant 0 : index
    %c0_6 = arith.constant 0 : index
    %4 = vector.load %arg4[%c0_5, %c0_6] : memref<3x1xf32, #tpu.memory_space<vmem>>, vector<3x1xf32>
    %cst = arith.constant dense<0xFF800000> : vector<128xf32>
    %5 = vector.multi_reduction <maximumf>, %0, %cst [0] : vector<3x128xf32> to vector<128xf32>
    %6 = vector.shape_cast %5 : vector<128xf32> to vector<1x128xf32>
    %7 = vector.broadcast %6 : vector<1x128xf32> to vector<3x128xf32>
    %8 = arith.subf %0, %7 : vector<3x128xf32>
    %9 = math.exp %8 : vector<3x128xf32>
    %cst_7 = arith.constant dense<0.000000e+00> : vector<128xf32>
    %10 = vector.multi_reduction <add>, %9, %cst_7 [0] : vector<3x128xf32> to vector<128xf32>
    %11 = vector.shape_cast %10 : vector<128xf32> to vector<1x128xf32>
    %12 = math.log %11 : vector<1x128xf32>
    %13 = vector.broadcast %12 : vector<1x128xf32> to vector<3x128xf32>
    %14 = arith.subf %8, %13 : vector<3x128xf32>
    %15 = tpu.reciprocal %11 : vector<1x128xf32> -> vector<1x128xf32>
    %16 = vector.broadcast %15 : vector<1x128xf32> to vector<3x128xf32>
    %17 = arith.mulf %9, %16 : vector<3x128xf32>
    %18 = tpu.iota {dimensions = array<i32: 0>} : vector<3x128xi32>
    %19 = vector.broadcast %2 : vector<1x128xi32> to vector<3x128xi32>
    %20 = arith.cmpi eq, %18, %19 : vector<3x128xi32>
    %21 = vector.shape_cast %3 : vector<3x1xf32> to vector<3x1xf32>
    %22 = vector.broadcast %21 : vector<3x1xf32> to vector<3x128xf32>
    %23 = vector.shape_cast %4 : vector<3x1xf32> to vector<3x1xf32>
    %24 = vector.broadcast %23 : vector<3x1xf32> to vector<3x128xf32>
    %25 = arith.select %20, %22, %24 : vector<3x128xi1>, vector<3x128xf32>
    %cst_8 = arith.constant 1.000000e+00 : f32
    %26 = vector.broadcast %cst_8 : f32 to vector<3x128xf32>
    %27 = arith.subf %26, %17 : vector<3x128xf32>
    %28 = arith.mulf %27, %27 : vector<3x128xf32>
    %29 = arith.mulf %25, %28 : vector<3x128xf32>
    %30 = arith.mulf %29, %14 : vector<3x128xf32>
    %cst_9 = arith.constant dense<0.000000e+00> : vector<128xf32>
    %31 = vector.multi_reduction <add>, %30, %cst_9 [0] : vector<3x128xf32> to vector<128xf32>
    %32 = vector.shape_cast %31 : vector<128xf32> to vector<1x128xf32>
    %c0_i32 = arith.constant 0 : i32
    %33 = arith.cmpi eq, %arg0, %c0_i32 : i32
    %34 = arith.extui %33 : i1 to i32
    %c0_i32_10 = arith.constant 0 : i32
    %35 = arith.cmpi ne, %34, %c0_i32_10 : i32
    scf.if %35 {
      %c128_i32 = arith.constant 128 : i32
      %39 = arith.muli %arg0, %c128_i32 : i32
      %40 = tpu.iota {dimensions = array<i32: 1>} : vector<1x128xi32>
      %41 = vector.broadcast %39 : i32 to vector<1x128xi32>
      %42 = arith.addi %41, %40 : vector<1x128xi32>
      %c8_i32 = arith.constant 8 : i32
      %43 = vector.broadcast %c8_i32 : i32 to vector<1x128xi32>
      %44 = arith.cmpi slt, %42, %43 : vector<1x128xi32>
      %cst_13 = arith.constant 0.000000e+00 : f32
      %45 = vector.broadcast %cst_13 : f32 to vector<1x128xf32>
      %46 = arith.select %44, %32, %45 : vector<1x128xi1>, vector<1x128xf32>
      %cst_14 = arith.constant dense<0.000000e+00> : vector<1xf32>
      %47 = vector.multi_reduction <add>, %46, %cst_14 [1] : vector<1x128xf32> to vector<1xf32>
      %48 = vector.shape_cast %47 : vector<1xf32> to vector<1x1xf32>
      %49 = vector.shape_cast %48 : vector<1x1xf32> to vector<1x1x1xf32>
      %c0_15 = arith.constant 0 : index
      %c0_16 = arith.constant 0 : index
      %c0_17 = arith.constant 0 : index
      %50 = vector.load %arg5[%c0_15, %c0_16, %c0_17] : memref<1x1x1xf32, #tpu.memory_space<vmem>>, vector<1x1x1xf32>
      tpu.vector_store %arg5[%c0_15, %c0_16, %c0_17], %49 {strides = array<i32>} : memref<1x1x1xf32, #tpu.memory_space<vmem>>, vector<1x1x1xf32>,
    } else {
    }
    %c0_i32_11 = arith.constant 0 : i32
    %36 = arith.cmpi slt, %arg0, %c0_i32_11 : i32
    %37 = arith.extui %36 : i1 to i32
    %c0_i32_12 = arith.constant 0 : i32
    %38 = arith.cmpi ne, %37, %c0_i32_12 : i32
    scf.if %38 {
      %cst_13 = arith.constant dense<0.000000e+00> : vector<1xf32>
      %39 = vector.multi_reduction <add>, %32, %cst_13 [1] : vector<1x128xf32> to vector<1xf32>
      %40 = vector.shape_cast %39 : vector<1xf32> to vector<1x1xf32>
      %41 = vector.shape_cast %40 : vector<1x1xf32> to vector<1x1x1xf32>
      %c0_14 = arith.constant 0 : index
      %c0_15 = arith.constant 0 : index
      %c0_16 = arith.constant 0 : index
      %42 = vector.load %arg5[%c0_14, %c0_15, %c0_16] : memref<1x1x1xf32, #tpu.memory_space<vmem>>, vector<1x1x1xf32>
      tpu.vector_store %arg5[%c0_14, %c0_15, %c0_16], %41 {strides = array<i32>} : memref<1x1x1xf32, #tpu.memory_space<vmem>>, vector<1x1x1xf32>,
    } else {
    }
    return
  }
  func.func @transform_0(%arg0: i32) -> (i32, i32) {
    %c0_i32 = arith.constant 0 : i32
    %c0_i32_0 = arith.constant 0 : i32
    return %c0_i32, %arg0 : i32, i32
  }
  func.func @transform_1(%arg0: i32) -> (i32, i32) {
    %c0_i32 = arith.constant 0 : i32
    %c0_i32_0 = arith.constant 0 : i32
    return %c0_i32, %arg0 : i32, i32
  }
  func.func @transform_2(%arg0: i32) -> (i32, i32) {
    %c0_i32 = arith.constant 0 : i32
    %c0_i32_0 = arith.constant 0 : i32
    %c0_i32_1 = arith.constant 0 : i32
    return %c0_i32, %c0_i32_0 : i32, i32
  }
  func.func @transform_3(%arg0: i32) -> (i32, i32) {
    %c0_i32 = arith.constant 0 : i32
    %c0_i32_0 = arith.constant 0 : i32
    %c0_i32_1 = arith.constant 0 : i32
    return %c0_i32, %c0_i32_0 : i32, i32
  }
  func.func @transform_4(%arg0: i32) -> (i32, i32, i32) {
    %c0_i32 = arith.constant 0 : i32
    %c0_i32_0 = arith.constant 0 : i32
    %c0_i32_1 = arith.constant 0 : i32
    return %arg0, %c0_i32, %c0_i32_0 : i32, i32, i32
  }
}

</mosaic_0001>

<llo_original>
// kernel: tpu_custom_call.1
$region0: #{tpu_custom_call.1}
  #allocation0 [shape = 'u32[]', space=smem, size = 0x4, offset = 0x4, fixed_abs, tag = 'smem constant byte address 0x4 - core index']
  #allocation1 [shape = 'u32[144,128]{1,0:T(1,128)}', space=vmem, size = 0x12000, scoped, tag = 'internal scratch']
  %s0 = inlined_call_operand.vmem [shape: f32[3,128], index: 0, kind: input, shape index: {}]
  %s1 = inlined_call_operand.vmem [shape: s8[1,128], index: 1, kind: input, shape index: {}]
  %s2 = inlined_call_operand.vmem [shape: f32[3,1], index: 2, kind: input, shape index: {}]
  %s3 = inlined_call_operand.vmem [shape: f32[3,1], index: 3, kind: input, shape index: {}]
  %s4 = inlined_call_operand.hbm [shape: f32[1,1,1], index: 4, kind: output, shape index: {}]
  %s5 = sld [smem:[#allocation0]]
  $region34: #{tpu_custom_call.1} parent=0
    _
  %s7 = ssub.s32 1, %s5
  %s8 = scalar_select 0, %s7, %s5
  $region1: #{tpu_custom_call.1} parent=0
    #allocation2 [shape = 'u8[512]{0}', space=vmem, size = 0x400, scoped, tag = 'output window, operand 0, single buffered']
    #allocation3 [shape = 's32[1]{0}', space=sflag, size = 0x4, scoped, tag = 'scoped memory for tpu_custom_call.1']
    %9 = vsyncpa [#allocation3], 0
    // Predicated region
    $region2: #{tpu_custom_call.1} parent=1 // pred_check
      _
    $region3: #{tpu_custom_call.1} parent=1 // pred_check_branch
      %11 = sbr.rel (0) target = $region5
    $region4: #{tpu_custom_call.1} parent=1 // pred_region
      _
    $region5: #{tpu_custom_call.1} parent=1 // pred_fallthru
      _
    // Predicated region
    $region6: #{tpu_custom_call.1} parent=1 // pred_check
      _
    $region7: #{tpu_custom_call.1} parent=1 // pred_check_branch
      %13 = sbr.rel (0) target = $region9
    $region8: #{tpu_custom_call.1} parent=1 // pred_region
      _
    $region9: #{tpu_custom_call.1} parent=1 // pred_fallthru
      _
    // Predicated region
    $region10: #{tpu_custom_call.1} parent=1 // pred_check
      _
    $region11: #{tpu_custom_call.1} parent=1 // pred_check_branch
      %15 = sbr.rel (0) target = $region13
    $region12: #{tpu_custom_call.1} parent=1 // pred_region
      _
    $region13: #{tpu_custom_call.1} parent=1 // pred_fallthru
      _
    // Predicated region
    $region14: #{tpu_custom_call.1} parent=1 // pred_check
      _
    $region15: #{tpu_custom_call.1} parent=1 // pred_check_branch
      %17 = sbr.rel (0) target = $region17
    $region16: #{tpu_custom_call.1} parent=1 // pred_region
      _
    $region17: #{tpu_custom_call.1} parent=1 // pred_fallthru
      _
    %v18 = vld [vmem:[%s0] sm:$0x7]
    %v19 = vld [vmem:[%s1] sm:$0x1]
    %v20 = vunpack.c.0.s8 %v19
    %v21 = vld [vmem:[%s2] sm:$0x7]
    %v22 = vld [vmem:[%s3] sm:$0x7]
    %vm23 = vcmask 1042432
    %v24 = vsel %vm23, %v18, -inf
    %v25 = vrot.slane %v24, 4
    %v26 = vmax.f32 %v24, %v25
    %v27 = vrot.slane %v26, 2
    %v28 = vmax.f32 %v26, %v27
    %v29 = vrot.slane %v28, 1
    %v30 = vmax.f32 %v28, %v29
    %v31 = vsub.f32 %v18, %v30
    %v32 = vmul.f32 %v31, 1.442695
    %v33 = vpow.pop %v32
    %v34 = vsel %vm23, %v33, 0.0
    %v35 = vrot.slane %v34, 4
    %v36 = vadd.f32 %v34, %v35
    %v37 = vrot.slane %v36, 2
    %v38 = vadd.f32 %v36, %v37
    %v39 = vrot.slane %v38, 1
    %v40 = vadd.f32 %v38, %v39
    %v41 = vlog2.pop %v40
    %v42 = vmul.f32 %v41, 0.6931472
    %v43 = vsub.f32 %v31, %v42
    %v44 = vrcp.pop %v40
    %v45 = vmul.f32 %v33, %v44
    %v46 = vlaneseq
    %v47 = vshrl.u32 %v46, 7
    %v48 = vlaneseq
    %v49 = vshrl.u32 %v48, 7
    %v50 = vsub.s32 0, %v49
    %v51 = vrot.slane %v20, %v50
    %vm52 = vcmp.eq.s32.totalorder %v47, %v51
    %54 = vset.pattern.permute.xlu0 0
    %55 = vperm.xlu0 %54, %v21
    %v56 = vpop.permute.xlu0 %55
    %59 = vset.pattern.permute.xlu0 0
    %60 = vperm.xlu0 %59, %v22
    %v61 = vpop.permute.xlu0 %60
    %v63 = vsel %vm52, %v56, %v61
    %v64 = vsub.f32 1.0, %v45
    %v65 = vmul.f32 %v64, %v64
    %v66 = vmul.f32 %v63, %v65
    %v67 = vmul.f32 %v66, %v43
    %v68 = vsel %vm23, %v67, 0.0
    %v69 = vrot.slane %v68, 4
    %v70 = vadd.f32 %v68, %v69
    %v71 = vrot.slane %v70, 2
    %v72 = vadd.f32 %v70, %v71
    %v73 = vrot.slane %v72, 1
    %v74 = vadd.f32 %v72, %v73
    %p75 = scmp.eq.s32.totalorder 0, 0
    // Predicated region
    $region18: #{tpu_custom_call.1} parent=1 // pred_check
      %p76 = pneg %p75
    $region19: #{tpu_custom_call.1} parent=1 // pred_check_branch
      %78 = sbr.rel (%p76) target = $region21
    $region20: #{tpu_custom_call.1} parent=1 // pred_region
      %s79 = smul.u32 0, 128
      %v80 = vlaneseq
      %v81 = vand.u32 %v80, 127
      %v82 = vstv %s79
      %v83 = vadd.s32 %v82, %v81
      %vm84 = vcmp.lt.s32.totalorder %v83, 8
      %v85 = vsel %vm84, %v74, 0.0
      %86 = vadd.xlane.f32.xlu0 %v85
      %v87 = vpop.xlane.xlu0 %86
      %vm88 = vcmask 0
      %89 = vst.msk [vmem:[#allocation2] sm:$0x1] %vm88, %v87
    $region21: #{tpu_custom_call.1} parent=1 // pred_fallthru
      _
    %p90 = scmp.lt.s32.totalorder 0, 0
    // Predicated region
    $region22: #{tpu_custom_call.1} parent=1 // pred_check
      %p91 = pneg %p90
    $region23: #{tpu_custom_call.1} parent=1 // pred_check_branch
      %93 = sbr.rel (%p91) target = $region25
    $region24: #{tpu_custom_call.1} parent=1 // pred_region
      %94 = vadd.xlane.f32.xlu0 %v74
      %v95 = vpop.xlane.xlu0 %94
      %vm96 = vcmask 0
      %97 = vst.msk [vmem:[#allocation2] sm:$0x1] %vm96, %v95
    $region25: #{tpu_custom_call.1} parent=1 // pred_fallthru
      _
    // Predicated region
    $region26: #{tpu_custom_call.1} parent=1 // pred_check
      _
    $region27: #{tpu_custom_call.1} parent=1 // pred_check_branch
      %99 = sbr.rel (0) target = $region29
    $region28: #{tpu_custom_call.1} parent=1 // pred_region
      %s101 = ssub.s32 16, 16
      %102 = vsyncadd [#allocation3], %s101
      %s104 = sshll.u32 [#allocation2], 4
      %s105 = int_to_ptr.vmem [resolvable:$true] %s104
      %107 = dma.vmem_to_hbm [thread:$0]  %s105, 16, %s4, [#allocation3]
    $region29: #{tpu_custom_call.1} parent=1 // pred_fallthru
      _
    // Predicated region
    $region30: #{tpu_custom_call.1} parent=1 // pred_check
      _
    $region31: #{tpu_custom_call.1} parent=1 // pred_check_branch
      %109 = sbr.rel (0) target = $region33
    $region32: #{tpu_custom_call.1} parent=1 // pred_region
      %110 = dma.done [#allocation3], 16
    $region33: #{tpu_custom_call.1} parent=1 // pred_fallthru
      _
    %111 = vsyncpa [#allocation3], 1

</llo_original>
